<compile_context>
chip_gen: v6e
topology: v6e:2x2x1
jax: 0.10.0
libtpu: 0.0.40
codegen_flags: <defaults>
</compile_context>

<pallas_src>
import numpy as np
import jax
import jax.numpy as jnp
from jax.experimental import pallas as pl
from jax.experimental.pallas import tpu as pltpu

FEATURE_NUM = 4                    # conv channels
SIGNAL_NUM = 5                     # conv length (4 * 5 = 20 = Linear in-features)
FLAT = FEATURE_NUM * SIGNAL_NUM    # 20
KSIZE = 3
PAD = 1
TN_MAX = 8192                      # max rows per grid step (amortizes per-step overhead)


def _round_up(a, b):
    return ((a + b - 1) // b) * b


def _conv1d_as_matmul(w, b):
    """Lower Conv1d(4,4,k=3,pad=1) to a dense (FLAT,FLAT) matrix M and a bias
    row (1,FLAT) such that, with channel-major flattening (idx = c*SIGNAL_NUM + l),
        conv1d(x, w, b).flatten() == x_row @ M + b_row.
    Built in numpy once (outside any trace)."""
    w = np.asarray(w, np.float32)
    b = np.asarray(b, np.float32)
    M = np.zeros((FLAT, FLAT), np.float32)
    for c_out in range(FEATURE_NUM):
        for c_in in range(FEATURE_NUM):
            for k in range(KSIZE):
                for l in range(SIGNAL_NUM):
                    s = l + k - PAD
                    if 0 <= s < SIGNAL_NUM:
                        M[c_in * SIGNAL_NUM + s,
                          c_out * SIGNAL_NUM + l] = w[c_out, c_in, k]
    return jnp.asarray(M), jnp.asarray(np.repeat(b, SIGNAL_NUM)[None, :])


def _fe_kernel(x_ref, m1_ref, b1_ref, m2_ref, b2_ref, w0_ref, b0_ref, o_ref):
    # x_ref: (TN, FLAT) f32 tile; weights/biases resident (constant index_map).
    x = x_ref[...]
    # conv1 as matmul + bias + ReLU
    h1 = jnp.dot(x, m1_ref[...], preferred_element_type=jnp.float32)
    h1 = jnp.maximum(h1 + b1_ref[...], 0.0)
    # conv2 as matmul + bias + ReLU
    h2 = jnp.dot(h1, m2_ref[...], preferred_element_type=jnp.float32)
    h2 = jnp.maximum(h2 + b2_ref[...], 0.0)
    # layer0 Linear
    o_ref[...] = (jnp.dot(h2, w0_ref[...], preferred_element_type=jnp.float32)
                  + b0_ref[...])


def feature_extract_forward(x, params, *, tn_max=TN_MAX):
    """x: (batch, seq, 4, 5) f32 -> (batch, seq, input_size) f32."""
    batch, seq, f, s = x.shape
    assert f == FEATURE_NUM and s == SIGNAL_NUM
    n = batch * seq

    m1, b1 = params["conv1_mat"], params["conv1_bias_row"]
    m2, b2 = params["conv2_mat"], params["conv2_bias_row"]
    w0t, b0 = params["lin_w_t"], params["lin_bias_row"]
    input_size = w0t.shape[1]

    # Natural row layout: (n, 20) is a free view of x; pad rows only if needed
    # so every block is full-size and every store stays in bounds.
    x2 = x.reshape(n, FLAT).astype(jnp.float32)
    tn = min(tn_max, _round_up(n, 8))
    n_pad = _round_up(n, tn)
    if n_pad != n:
        x2 = jnp.pad(x2, ((0, n_pad - n), (0, 0)))

    out = pl.pallas_call(
        _fe_kernel,
        out_shape=jax.ShapeDtypeStruct((n_pad, input_size), jnp.float32),
        grid=(n_pad // tn,),
        in_specs=[
            pl.BlockSpec((tn, FLAT), lambda i: (i, 0)),           # x tile
            pl.BlockSpec((FLAT, FLAT), lambda i: (0, 0)),         # M1 (resident)
            pl.BlockSpec((1, FLAT), lambda i: (0, 0)),            # b1
            pl.BlockSpec((FLAT, FLAT), lambda i: (0, 0)),         # M2 (resident)
            pl.BlockSpec((1, FLAT), lambda i: (0, 0)),            # b2
            pl.BlockSpec((FLAT, input_size), lambda i: (0, 0)),   # W0^T (resident)
            pl.BlockSpec((1, input_size), lambda i: (0, 0)),      # b0
        ],
        out_specs=pl.BlockSpec((tn, input_size), lambda i: (i, 0)),
        compiler_params=pltpu.CompilerParams(
            dimension_semantics=("parallel",)),
    )(x2, m1, b1, m2, b2, w0t, b0)

    return out[:n].reshape(batch, seq, input_size)


def init_params(key, input_size):
    """Deterministic synthetic parameters matching the PyTorch module's shapes."""
    k1, k2, k3, k4, k5, k6 = jax.random.split(key, 6)
    # Conv1d(4, 4, kernel_size=3): weight (4,4,3), bias (4,)
    conv1_w = jax.random.uniform(k1, (4, 4, 3), jnp.float32, -0.3, 0.3)
    conv1_b = jax.random.uniform(k2, (4,), jnp.float32, -0.3, 0.3)
    conv2_w = jax.random.uniform(k3, (4, 4, 3), jnp.float32, -0.3, 0.3)
    conv2_b = jax.random.uniform(k4, (4,), jnp.float32, -0.3, 0.3)
    # Linear(20, input_size): weight (input_size, 20), bias (input_size,)
    lin_w = jax.random.uniform(k5, (input_size, FLAT), jnp.float32, -0.2, 0.2)
    lin_b = jax.random.uniform(k6, (input_size,), jnp.float32, -0.2, 0.2)

    c1m, c1b = _conv1d_as_matmul(conv1_w, conv1_b)
    c2m, c2b = _conv1d_as_matmul(conv2_w, conv2_b)
    return {
        "conv1_mat": c1m, "conv1_bias_row": c1b,
        "conv2_mat": c2m, "conv2_bias_row": c2b,
        "lin_w_t": jnp.asarray(lin_w).T,               # (20, input_size)
        "lin_bias_row": jnp.asarray(lin_b)[None, :],   # (1, input_size)
        # raw f32 params kept for the pure-JAX reference check
        "_raw": (conv1_w, conv1_b, conv2_w, conv2_b, lin_w, lin_b),
    }


def _reference_forward(x, params):
    """Pure-JAX f32 reference reproducing the PyTorch forward."""
    conv1_w, conv1_b, conv2_w, conv2_b, lin_w, lin_b = params["_raw"]
    b, s, f, l = x.shape
    xi = x.reshape(b * s, f, l)

    def conv1d(inp, w, bias):
        out = jax.lax.conv_general_dilated(
            inp, w, window_strides=(1,), padding=((PAD, PAD),),
            dimension_numbers=("NCH", "OIH", "NCH"))
        return out + bias[None, :, None]

    h = jax.nn.relu(conv1d(xi, conv1_w, conv1_b))
    h = jax.nn.relu(conv1d(h, conv2_w, conv2_b))
    h = h.reshape(b * s, f * l)
    o = h @ lin_w.T + lin_b[None, :]
    return o.reshape(b, s, -1)


if __name__ == "__main__":
    batch, seq, input_size = 2, 8, 32
    key = jax.random.PRNGKey(0)
    kx, kp = jax.random.split(key)
    x = jax.random.normal(kx, (batch, seq, FEATURE_NUM, SIGNAL_NUM), jnp.float32)
    params = init_params(kp, input_size)

    out = feature_extract_forward(x, params)
    out = jax.block_until_ready(out)

    ref = _reference_forward(x, params)
    assert out.shape == (batch, seq, input_size)
    # Loose enough to tolerate MXU bf16-pass lowering of f32 matmuls.
    assert jnp.allclose(out, ref, atol=3e-2, rtol=3e-2), "mismatch vs reference"
    print("KERNEL_OK")
</pallas_src>

<mosaic_0001>
module attributes {stable_mosaic.version = 11 : i64} {
  func.func @_fe_kernel(%arg0: i32, %arg1: memref<16x20xf32, #tpu.memory_space<vmem>>, %arg2: memref<20x20xf32, #tpu.memory_space<vmem>>, %arg3: memref<1x20xf32, #tpu.memory_space<vmem>>, %arg4: memref<20x20xf32, #tpu.memory_space<vmem>>, %arg5: memref<1x20xf32, #tpu.memory_space<vmem>>, %arg6: memref<20x32xf32, #tpu.memory_space<vmem>>, %arg7: memref<1x32xf32, #tpu.memory_space<vmem>>, %arg8: memref<16x32xf32, #tpu.memory_space<vmem>>) attributes {dimension_semantics = [#tpu.dimension_semantics<parallel>], iteration_bounds = array<i64: 1>, scalar_prefetch = 0 : i64, scratch_operands = 0 : i64, tpu.core_type = #tpu.core_type<tc>, window_params = [{transform_indices = @transform_0, window_bounds = array<i64: 16, 20>}, {pipeline_mode = #tpu.pipeline_mode<synchronous>, transform_indices = @transform_1, window_bounds = array<i64: 20, 20>}, {pipeline_mode = #tpu.pipeline_mode<synchronous>, transform_indices = @transform_2, window_bounds = array<i64: 1, 20>}, {pipeline_mode = #tpu.pipeline_mode<synchronous>, transform_indices = @transform_3, window_bounds = array<i64: 20, 20>}, {pipeline_mode = #tpu.pipeline_mode<synchronous>, transform_indices = @transform_4, window_bounds = array<i64: 1, 20>}, {pipeline_mode = #tpu.pipeline_mode<synchronous>, transform_indices = @transform_5, window_bounds = array<i64: 20, 32>}, {pipeline_mode = #tpu.pipeline_mode<synchronous>, transform_indices = @transform_6, window_bounds = array<i64: 1, 32>}, {transform_indices = @transform_7, window_bounds = array<i64: 16, 32>}]} {
    %c0 = arith.constant 0 : index
    %c0_0 = arith.constant 0 : index
    %0 = vector.load %arg1[%c0, %c0_0] : memref<16x20xf32, #tpu.memory_space<vmem>>, vector<16x20xf32>
    %c0_1 = arith.constant 0 : index
    %c0_2 = arith.constant 0 : index
    %1 = vector.load %arg2[%c0_1, %c0_2] : memref<20x20xf32, #tpu.memory_space<vmem>>, vector<20x20xf32>
    %cst = arith.constant dense<0.000000e+00> : vector<16x20xf32>
    %2 = tpu.matmul %0, %1, %cst {dimension_numbers = #tpu.dot_dimension_numbers<[1], [0], [0], [1], [0, 0, 1, 1], [], []>} : vector<16x20xf32>, vector<20x20xf32>, vector<16x20xf32> -> vector<16x20xf32>
    %c0_3 = arith.constant 0 : index
    %c0_4 = arith.constant 0 : index
    %3 = vector.load %arg3[%c0_3, %c0_4] : memref<1x20xf32, #tpu.memory_space<vmem>>, vector<1x20xf32>
    %4 = vector.broadcast %3 : vector<1x20xf32> to vector<16x20xf32>
    %5 = arith.addf %2, %4 : vector<16x20xf32>
    %cst_5 = arith.constant 0.000000e+00 : f32
    %6 = vector.broadcast %cst_5 : f32 to vector<16x20xf32>
    %7 = arith.maximumf %5, %6 : vector<16x20xf32>
    %c0_6 = arith.constant 0 : index
    %c0_7 = arith.constant 0 : index
    %8 = vector.load %arg4[%c0_6, %c0_7] : memref<20x20xf32, #tpu.memory_space<vmem>>, vector<20x20xf32>
    %cst_8 = arith.constant dense<0.000000e+00> : vector<16x20xf32>
    %9 = tpu.matmul %7, %8, %cst_8 {dimension_numbers = #tpu.dot_dimension_numbers<[1], [0], [0], [1], [0, 0, 1, 1], [], []>} : vector<16x20xf32>, vector<20x20xf32>, vector<16x20xf32> -> vector<16x20xf32>
    %c0_9 = arith.constant 0 : index
    %c0_10 = arith.constant 0 : index
    %10 = vector.load %arg5[%c0_9, %c0_10] : memref<1x20xf32, #tpu.memory_space<vmem>>, vector<1x20xf32>
    %11 = vector.broadcast %10 : vector<1x20xf32> to vector<16x20xf32>
    %12 = arith.addf %9, %11 : vector<16x20xf32>
    %cst_11 = arith.constant 0.000000e+00 : f32
    %13 = vector.broadcast %cst_11 : f32 to vector<16x20xf32>
    %14 = arith.maximumf %12, %13 : vector<16x20xf32>
    %c0_12 = arith.constant 0 : index
    %c0_13 = arith.constant 0 : index
    %15 = vector.load %arg6[%c0_12, %c0_13] : memref<20x32xf32, #tpu.memory_space<vmem>>, vector<20x32xf32>
    %cst_14 = arith.constant dense<0.000000e+00> : vector<16x32xf32>
    %16 = tpu.matmul %14, %15, %cst_14 {dimension_numbers = #tpu.dot_dimension_numbers<[1], [0], [0], [1], [0, 0, 1, 1], [], []>} : vector<16x20xf32>, vector<20x32xf32>, vector<16x32xf32> -> vector<16x32xf32>
    %c0_15 = arith.constant 0 : index
    %c0_16 = arith.constant 0 : index
    %17 = vector.load %arg7[%c0_15, %c0_16] : memref<1x32xf32, #tpu.memory_space<vmem>>, vector<1x32xf32>
    %18 = vector.broadcast %17 : vector<1x32xf32> to vector<16x32xf32>
    %19 = arith.addf %16, %18 : vector<16x32xf32>
    %c0_17 = arith.constant 0 : index
    %c0_18 = arith.constant 0 : index
    %20 = vector.load %arg8[%c0_17, %c0_18] : memref<16x32xf32, #tpu.memory_space<vmem>>, vector<16x32xf32>
    tpu.vector_store %arg8[%c0_17, %c0_18], %19 {strides = array<i32>} : memref<16x32xf32, #tpu.memory_space<vmem>>, vector<16x32xf32>,
    return
  }
  func.func @transform_0(%arg0: i32) -> (i32, i32) {
    %c0_i32 = arith.constant 0 : i32
    %c0_i32_0 = arith.constant 0 : i32
    return %arg0, %c0_i32 : i32, i32
  }
  func.func @transform_1(%arg0: i32) -> (i32, i32) {
    %c0_i32 = arith.constant 0 : i32
    %c0_i32_0 = arith.constant 0 : i32
    %c0_i32_1 = arith.constant 0 : i32
    return %c0_i32, %c0_i32_0 : i32, i32
  }
  func.func @transform_2(%arg0: i32) -> (i32, i32) {
    %c0_i32 = arith.constant 0 : i32
    %c0_i32_0 = arith.constant 0 : i32
    %c0_i32_1 = arith.constant 0 : i32
    return %c0_i32, %c0_i32_0 : i32, i32
  }
  func.func @transform_3(%arg0: i32) -> (i32, i32) {
    %c0_i32 = arith.constant 0 : i32
    %c0_i32_0 = arith.constant 0 : i32
    %c0_i32_1 = arith.constant 0 : i32
    return %c0_i32, %c0_i32_0 : i32, i32
  }
  func.func @transform_4(%arg0: i32) -> (i32, i32) {
    %c0_i32 = arith.constant 0 : i32
    %c0_i32_0 = arith.constant 0 : i32
    %c0_i32_1 = arith.constant 0 : i32
    return %c0_i32, %c0_i32_0 : i32, i32
  }
  func.func @transform_5(%arg0: i32) -> (i32, i32) {
    %c0_i32 = arith.constant 0 : i32
    %c0_i32_0 = arith.constant 0 : i32
    %c0_i32_1 = arith.constant 0 : i32
    return %c0_i32, %c0_i32_0 : i32, i32
  }
  func.func @transform_6(%arg0: i32) -> (i32, i32) {
    %c0_i32 = arith.constant 0 : i32
    %c0_i32_0 = arith.constant 0 : i32
    %c0_i32_1 = arith.constant 0 : i32
    return %c0_i32, %c0_i32_0 : i32, i32
  }
  func.func @transform_7(%arg0: i32) -> (i32, i32) {
    %c0_i32 = arith.constant 0 : i32
    %c0_i32_0 = arith.constant 0 : i32
    return %arg0, %c0_i32 : i32, i32
  }
}

</mosaic_0001>

<llo_original>
// kernel: tpu_custom_call.1
$region0: #{tpu_custom_call.1}
  #allocation0 [shape = 'u32[]', space=smem, size = 0x4, offset = 0x4, fixed_abs, tag = 'smem constant byte address 0x4 - core index']
  #allocation1 [shape = 'u32[144,128]{1,0:T(1,128)}', space=vmem, size = 0x12000, scoped, tag = 'internal scratch']
  %s0 = inlined_call_operand.hbm [shape: f32[16,20], index: 0, kind: input, shape index: {}]
  %s1 = inlined_call_operand.hbm [shape: f32[20,20], index: 1, kind: input, shape index: {}]
  %s2 = inlined_call_operand.vmem [shape: f32[1,20], index: 2, kind: input, shape index: {}]
  %s3 = inlined_call_operand.hbm [shape: f32[20,20], index: 3, kind: input, shape index: {}]
  %s4 = inlined_call_operand.vmem [shape: f32[1,20], index: 4, kind: input, shape index: {}]
  %s5 = inlined_call_operand.hbm [shape: f32[20,32], index: 5, kind: input, shape index: {}]
  %s6 = inlined_call_operand.vmem [shape: f32[1,32], index: 6, kind: input, shape index: {}]
  %s7 = inlined_call_operand.hbm [shape: f32[16,32], index: 7, kind: output, shape index: {}]
  %s8 = sld [smem:[#allocation0]]
  $region54: #{tpu_custom_call.1} parent=0
    _
  %s10 = ssub.s32 1, %s8
  %s11 = scalar_select 0, %s10, %s8
  $region1: #{tpu_custom_call.1} parent=0
    #allocation2 [shape = 'u8[8192]{0}', space=vmem, size = 0x2000, scoped, tag = 'input window, operand 0, single buffered']
    #allocation3 [shape = 's32[1]{0}', space=sflag, size = 0x4, scoped, tag = 'scoped memory for tpu_custom_call.1']
    #allocation4 [shape = 's32[1]{0}', space=sflag, size = 0x4, scoped, tag = 'scoped memory for tpu_custom_call.1']
    #allocation5 [shape = 'u8[12288]{0}', space=vmem, size = 0x3000, scoped, tag = 'input window, operand 1, single buffered']
    #allocation6 [shape = 's32[1]{0}', space=sflag, size = 0x4, scoped, tag = 'scoped memory for tpu_custom_call.1']
    #allocation7 [shape = 'u8[12288]{0}', space=vmem, size = 0x3000, scoped, tag = 'input window, operand 3, single buffered']
    #allocation8 [shape = 'u8[12288]{0}', space=vmem, size = 0x3000, scoped, tag = 'input window, operand 5, single buffered']
    #allocation9 [shape = 's32[1]{0}', space=sflag, size = 0x4, scoped, tag = 'scoped memory for tpu_custom_call.1']
    #allocation10 [shape = 'u8[8192]{0}', space=vmem, size = 0x2000, scoped, tag = 'output window, operand 0, single buffered']
    %12 = vsyncpa [#allocation3], 0
    %13 = vsyncpa [#allocation6], 0
    %14 = vsyncpa [#allocation9], 0
    %15 = vsyncpa [#allocation4], 0
    // Predicated region
    $region2: #{tpu_custom_call.1} parent=1 // pred_check
      _
    $region3: #{tpu_custom_call.1} parent=1 // pred_check_branch
      %17 = sbr.rel (0) target = $region5
    $region4: #{tpu_custom_call.1} parent=1 // pred_region
      %s19 = ssub.s32 256, 256
      %20 = vsyncadd [#allocation3], %s19
      %s21 = sshll.u32 [#allocation2], 4
      %s22 = int_to_ptr.vmem [resolvable:$true] %s21
      %27 = dma.hbm_to_vmem [thread:$0]  %s0, 256, %s22, [#allocation3], 128, 128, 8
    $region5: #{tpu_custom_call.1} parent=1 // pred_fallthru
      _
    // Predicated region
    $region6: #{tpu_custom_call.1} parent=1 // pred_check
      _
    $region7: #{tpu_custom_call.1} parent=1 // pred_check_branch
      %29 = sbr.rel (0) target = $region9
    $region8: #{tpu_custom_call.1} parent=1 // pred_region
      %s31 = ssub.s32 384, 384
      %32 = vsyncadd [#allocation6], %s31
      %s33 = sshll.u32 [#allocation5], 4
      %s34 = int_to_ptr.vmem [resolvable:$true] %s33
      %39 = dma.hbm_to_vmem [thread:$0]  %s1, 384, %s34, [#allocation6], 128, 128, 8
    $region9: #{tpu_custom_call.1} parent=1 // pred_fallthru
      _
    // Predicated region
    $region10: #{tpu_custom_call.1} parent=1 // pred_check
      _
    $region11: #{tpu_custom_call.1} parent=1 // pred_check_branch
      %41 = sbr.rel (0) target = $region13
    $region12: #{tpu_custom_call.1} parent=1 // pred_region
      _
    $region13: #{tpu_custom_call.1} parent=1 // pred_fallthru
      _
    // Predicated region
    $region14: #{tpu_custom_call.1} parent=1 // pred_check
      _
    $region15: #{tpu_custom_call.1} parent=1 // pred_check_branch
      %43 = sbr.rel (0) target = $region17
    $region16: #{tpu_custom_call.1} parent=1 // pred_region
      %s45 = ssub.s32 384, 384
      %46 = vsyncadd [#allocation6], %s45
      %s47 = sshll.u32 [#allocation7], 4
      %s48 = int_to_ptr.vmem [resolvable:$true] %s47
      %53 = dma.hbm_to_vmem [thread:$0]  %s3, 384, %s48, [#allocation6], 128, 128, 8
    $region17: #{tpu_custom_call.1} parent=1 // pred_fallthru
      _
    // Predicated region
    $region18: #{tpu_custom_call.1} parent=1 // pred_check
      _
    $region19: #{tpu_custom_call.1} parent=1 // pred_check_branch
      %55 = sbr.rel (0) target = $region21
    $region20: #{tpu_custom_call.1} parent=1 // pred_region
      _
    $region21: #{tpu_custom_call.1} parent=1 // pred_fallthru
      _
    // Predicated region
    $region22: #{tpu_custom_call.1} parent=1 // pred_check
      _
    $region23: #{tpu_custom_call.1} parent=1 // pred_check_branch
      %57 = sbr.rel (0) target = $region25
    $region24: #{tpu_custom_call.1} parent=1 // pred_region
      %s59 = ssub.s32 384, 384
      %60 = vsyncadd [#allocation9], %s59
      %s61 = sshll.u32 [#allocation8], 4
      %s62 = int_to_ptr.vmem [resolvable:$true] %s61
      %67 = dma.hbm_to_vmem [thread:$0]  %s5, 384, %s62, [#allocation9], 128, 128, 8
    $region25: #{tpu_custom_call.1} parent=1 // pred_fallthru
      _
    // Predicated region
    $region26: #{tpu_custom_call.1} parent=1 // pred_check
      _
    $region27: #{tpu_custom_call.1} parent=1 // pred_check_branch
      %69 = sbr.rel (0) target = $region29
    $region28: #{tpu_custom_call.1} parent=1 // pred_region
      _
    $region29: #{tpu_custom_call.1} parent=1 // pred_fallthru
      _
    // Predicated region
    $region30: #{tpu_custom_call.1} parent=1 // pred_check
      _
    $region31: #{tpu_custom_call.1} parent=1 // pred_check_branch
      %71 = sbr.rel (0) target = $region33
    $region32: #{tpu_custom_call.1} parent=1 // pred_region
      %72 = dma.done [#allocation3], 256
    $region33: #{tpu_custom_call.1} parent=1 // pred_fallthru
      _
    // Predicated region
    $region34: #{tpu_custom_call.1} parent=1 // pred_check
      _
    $region35: #{tpu_custom_call.1} parent=1 // pred_check_branch
      %74 = sbr.rel (0) target = $region37
    $region36: #{tpu_custom_call.1} parent=1 // pred_region
      %75 = dma.done [#allocation6], 384
    $region37: #{tpu_custom_call.1} parent=1 // pred_fallthru
      _
    // Predicated region
    $region38: #{tpu_custom_call.1} parent=1 // pred_check
      _
    $region39: #{tpu_custom_call.1} parent=1 // pred_check_branch
      %77 = sbr.rel (0) target = $region41
    $region40: #{tpu_custom_call.1} parent=1 // pred_region
      %78 = dma.done [#allocation6], 384
    $region41: #{tpu_custom_call.1} parent=1 // pred_fallthru
      _
    // Predicated region
    $region42: #{tpu_custom_call.1} parent=1 // pred_check
      _
    $region43: #{tpu_custom_call.1} parent=1 // pred_check_branch
      %80 = sbr.rel (0) target = $region45
    $region44: #{tpu_custom_call.1} parent=1 // pred_region
      %81 = dma.done [#allocation9], 384
    $region45: #{tpu_custom_call.1} parent=1 // pred_fallthru
      _
    %v82 = vld [vmem:[#allocation2] sm:$0xff]
    %v83 = vld [vmem:[#allocation2 + $0x8] sm:$0xff]
    %v84 = vld [vmem:[#allocation5] sm:$0xff]
    %v85 = vld [vmem:[#allocation5 + $0x8] sm:$0xff]
    %v86 = vld [vmem:[#allocation5 + $0x10] sm:$0xf]
    %v87 = vld [vmem:[%s2] sm:$0x1]
    %v89 = vlaneseq
    %v90 = vshrl.u32 %v89, 7
    %v91 = vsub.s32 0, %v90
    %v92 = vrot.slane %v87, %v91
    %vm94 = vcmask 162816
    %v96 = vsel %vm94, %v82, 0
    %v99 = vsel %vm94, %v83, 0
    %vm101 = vcmask 1043456
    %v103 = vsel %vm101, %v86, 0
    %105 = vmatprep.subr.mxu0 0.0
    %106 = vmatpush1.msra.mxu0 0.0
    %107 = vmatprep.subr.mxu0 0.0
    %108 = vmatpush1.msra.mxu0 0.0
    %109 = vmatprep.subr.mxu0 0.0
    %110 = vmatpush1.msra.mxu0 0.0
    %111 = vmatprep.subr.mxu0 0.0
    %112 = vmatpush1.msra.mxu0 0.0
    %113 = vmatprep.subr.mxu0 0.0
    %114 = vmatpush1.msra.mxu0 0.0
    %115 = vmatprep.subr.mxu0 0.0
    %116 = vmatpush1.msra.mxu0 0.0
    %117 = vmatprep.subr.mxu0 0.0
    %118 = vmatpush1.msra.mxu0 0.0
    %119 = vmatprep.subr.mxu0 0.0
    %120 = vmatpush1.msra.mxu0 0.0
    %121 = vmatprep.subr.mxu0 0.0
    %122 = vmatpush1.msra.mxu0 0.0
    %123 = vmatprep.subr.mxu0 0.0
    %124 = vmatpush1.msra.mxu0 0.0
    %125 = vmatprep.subr.mxu0 0.0
    %126 = vmatpush1.msra.mxu0 0.0
    %127 = vmatprep.subr.mxu0 0.0
    %128 = vmatpush1.msra.mxu0 0.0
    %129 = vmatprep.subr.mxu0 0.0
    %130 = vmatpush1.msra.mxu0 0.0
    %131 = vmatprep.subr.mxu0 0.0
    %132 = vmatpush1.msra.mxu0 %v103
    %133 = vmatprep.subr.mxu0 0.0
    %134 = vmatpush1.msra.mxu0 %v85
    %135 = vmatprep.subr.mxu0 0.0
    %136 = vmatpush1.msra.mxu0 %v84
    %137 = vmatprep.subr.mxu0 0.0
    %138 = vmatpush2.msra.mxu0 0.0
    %139 = vmatprep.subr.mxu0 0.0
    %140 = vmatpush2.msra.mxu0 0.0
    %141 = vmatprep.subr.mxu0 0.0
    %142 = vmatpush2.msra.mxu0 0.0
    %143 = vmatprep.subr.mxu0 0.0
    %144 = vmatpush2.msra.mxu0 0.0
    %145 = vmatprep.subr.mxu0 0.0
    %146 = vmatpush2.msra.mxu0 0.0
    %147 = vmatprep.subr.mxu0 0.0
    %148 = vmatpush2.msra.mxu0 0.0
    %149 = vmatprep.subr.mxu0 0.0
    %150 = vmatpush2.msra.mxu0 0.0
    %151 = vmatprep.subr.mxu0 0.0
    %152 = vmatpush2.msra.mxu0 0.0
    %153 = vmatprep.subr.mxu0 0.0
    %154 = vmatpush2.msra.mxu0 0.0
    %155 = vmatprep.subr.mxu0 0.0
    %156 = vmatpush2.msra.mxu0 0.0
    %157 = vmatprep.subr.mxu0 0.0
    %158 = vmatpush2.msra.mxu0 0.0
    %159 = vmatprep.subr.mxu0 0.0
    %160 = vmatpush2.msra.mxu0 0.0
    %161 = vmatprep.subr.mxu0 0.0
    %162 = vmatpush2.msra.mxu0 0.0
    %163 = vmatprep.subr.mxu0 0.0
    %164 = vmatpush2.msra.mxu0 0.0
    %165 = vmatprep.subr.mxu0 0.0
    %166 = vmatpush2.msra.mxu0 0.0
    %167 = vmatprep.subr.mxu0 0.0
    %168 = vmatpush2.msra.mxu0 0.0
    %169 = vmatprep.mubr.f32.mxu0 0.0
    %170 = vmatmul.mubr.f32.gmra.mxu0 %v96
    %v171 = vpop.f32.mrf.mxu0
    %v172 = vadd.f32 %v92, %v171
    %v173 = vpop.f32.mrf.mxu0
    %174 = vmatprep.mubr.f32.mxu0 0.0
    %175 = vmatmul.mubr.f32.gmra.mxu0 %v99
    %v176 = vpop.f32.mrf.mxu0
    %v177 = vadd.f32 %v92, %v176
    %v178 = vpop.f32.mrf.mxu0
    %179 = vdwg.mxu0
    %v180 = vmax.f32 %v172, 0.0
    %v181 = vmax.f32 %v177, 0.0
    %v182 = vld [vmem:[#allocation7] sm:$0xff]
    %v183 = vld [vmem:[#allocation7 + $0x8] sm:$0xff]
    %v184 = vld [vmem:[#allocation7 + $0x10] sm:$0xf]
    %v185 = vld [vmem:[%s4] sm:$0x1]
    %v187 = vlaneseq
    %v188 = vshrl.u32 %v187, 7
    %v189 = vsub.s32 0, %v188
    %v190 = vrot.slane %v185, %v189
    %v193 = vsel %vm94, %v180, 0
    %v196 = vsel %vm94, %v181, 0
    %v199 = vsel %vm101, %v184, 0
    %201 = vmatprep.subr.mxu0 0.0
    %202 = vmatpush1.msra.mxu0 0.0
    %203 = vmatprep.subr.mxu0 0.0
    %204 = vmatpush1.msra.mxu0 0.0
    %205 = vmatprep.subr.mxu0 0.0
    %206 = vmatpush1.msra.mxu0 0.0
    %207 = vmatprep.subr.mxu0 0.0
    %208 = vmatpush1.msra.mxu0 0.0
    %209 = vmatprep.subr.mxu0 0.0
    %210 = vmatpush1.msra.mxu0 0.0
    %211 = vmatprep.subr.mxu0 0.0
    %212 = vmatpush1.msra.mxu0 0.0
    %213 = vmatprep.subr.mxu0 0.0
    %214 = vmatpush1.msra.mxu0 0.0
    %215 = vmatprep.subr.mxu0 0.0
    %216 = vmatpush1.msra.mxu0 0.0
    %217 = vmatprep.subr.mxu0 0.0
    %218 = vmatpush1.msra.mxu0 0.0
    %219 = vmatprep.subr.mxu0 0.0
    %220 = vmatpush1.msra.mxu0 0.0
    %221 = vmatprep.subr.mxu0 0.0
    %222 = vmatpush1.msra.mxu0 0.0
    %223 = vmatprep.subr.mxu0 0.0
    %224 = vmatpush1.msra.mxu0 0.0
    %225 = vmatprep.subr.mxu0 0.0
    %226 = vmatpush1.msra.mxu0 0.0
    %227 = vmatprep.subr.mxu0 0.0
    %228 = vmatpush1.msra.mxu0 %v199
    %229 = vmatprep.subr.mxu0 0.0
    %230 = vmatpush1.msra.mxu0 %v183
    %231 = vmatprep.subr.mxu0 0.0
    %232 = vmatpush1.msra.mxu0 %v182
    %233 = vmatprep.subr.mxu0 0.0
    %234 = vmatpush2.msra.mxu0 0.0
    %235 = vmatprep.subr.mxu0 0.0
    %236 = vmatpush2.msra.mxu0 0.0
    %237 = vmatprep.subr.mxu0 0.0
    %238 = vmatpush2.msra.mxu0 0.0
    %239 = vmatprep.subr.mxu0 0.0
    %240 = vmatpush2.msra.mxu0 0.0
    %241 = vmatprep.subr.mxu0 0.0
    %242 = vmatpush2.msra.mxu0 0.0
    %243 = vmatprep.subr.mxu0 0.0
    %244 = vmatpush2.msra.mxu0 0.0
    %245 = vmatprep.subr.mxu0 0.0
    %246 = vmatpush2.msra.mxu0 0.0
    %247 = vmatprep.subr.mxu0 0.0
    %248 = vmatpush2.msra.mxu0 0.0
    %249 = vmatprep.subr.mxu0 0.0
    %250 = vmatpush2.msra.mxu0 0.0
    %251 = vmatprep.subr.mxu0 0.0
    %252 = vmatpush2.msra.mxu0 0.0
    %253 = vmatprep.subr.mxu0 0.0
    %254 = vmatpush2.msra.mxu0 0.0
    %255 = vmatprep.subr.mxu0 0.0
    %256 = vmatpush2.msra.mxu0 0.0
    %257 = vmatprep.subr.mxu0 0.0
    %258 = vmatpush2.msra.mxu0 0.0
    %259 = vmatprep.subr.mxu0 0.0
    %260 = vmatpush2.msra.mxu0 0.0
    %261 = vmatprep.subr.mxu0 0.0
    %262 = vmatpush2.msra.mxu0 0.0
    %263 = vmatprep.subr.mxu0 0.0
    %264 = vmatpush2.msra.mxu0 0.0
    %265 = vmatprep.mubr.f32.mxu0 0.0
    %266 = vmatmul.mubr.f32.gmra.mxu0 %v193
    %v267 = vpop.f32.mrf.mxu0
    %v268 = vadd.f32 %v190, %v267
    %v269 = vpop.f32.mrf.mxu0
    %270 = vmatprep.mubr.f32.mxu0 0.0
    %271 = vmatmul.mubr.f32.gmra.mxu0 %v196
    %v272 = vpop.f32.mrf.mxu0
    %v273 = vadd.f32 %v190, %v272
    %v274 = vpop.f32.mrf.mxu0
    %275 = vdwg.mxu0
    %v276 = vmax.f32 %v268, 0.0
    %v277 = vmax.f32 %v273, 0.0
    %v278 = vld [vmem:[#allocation8] sm:$0xff]
    %v279 = vld [vmem:[#allocation8 + $0x8] sm:$0xff]
    %v280 = vld [vmem:[#allocation8 + $0x10] sm:$0xf]
    %v281 = vld [vmem:[%s6] sm:$0x1]
    %v283 = vlaneseq
    %v284 = vshrl.u32 %v283, 7
    %v285 = vsub.s32 0, %v284
    %v286 = vrot.slane %v281, %v285
    %v289 = vsel %vm94, %v276, 0
    %v292 = vsel %vm94, %v277, 0
    %v295 = vsel %vm101, %v280, 0
    %297 = vmatprep.subr.mxu0 0.0
    %298 = vmatpush1.msra.mxu0 0.0
    %299 = vmatprep.subr.mxu0 0.0
    %300 = vmatpush1.msra.mxu0 0.0
    %301 = vmatprep.subr.mxu0 0.0
    %302 = vmatpush1.msra.mxu0 0.0
    %303 = vmatprep.subr.mxu0 0.0
    %304 = vmatpush1.msra.mxu0 0.0
    %305 = vmatprep.subr.mxu0 0.0
    %306 = vmatpush1.msra.mxu0 0.0
    %307 = vmatprep.subr.mxu0 0.0
    %308 = vmatpush1.msra.mxu0 0.0
    %309 = vmatprep.subr.mxu0 0.0
    %310 = vmatpush1.msra.mxu0 0.0
    %311 = vmatprep.subr.mxu0 0.0
    %312 = vmatpush1.msra.mxu0 0.0
    %313 = vmatprep.subr.mxu0 0.0
    %314 = vmatpush1.msra.mxu0 0.0
    %315 = vmatprep.subr.mxu0 0.0
    %316 = vmatpush1.msra.mxu0 0.0
    %317 = vmatprep.subr.mxu0 0.0
    %318 = vmatpush1.msra.mxu0 0.0
    %319 = vmatprep.subr.mxu0 0.0
    %320 = vmatpush1.msra.mxu0 0.0
    %321 = vmatprep.subr.mxu0 0.0
    %322 = vmatpush1.msra.mxu0 0.0
    %323 = vmatprep.subr.mxu0 0.0
    %324 = vmatpush1.msra.mxu0 %v295
    %325 = vmatprep.subr.mxu0 0.0
    %326 = vmatpush1.msra.mxu0 %v279
    %327 = vmatprep.subr.mxu0 0.0
    %328 = vmatpush1.msra.mxu0 %v278
    %329 = vmatprep.subr.mxu0 0.0
    %330 = vmatpush2.msra.mxu0 0.0
    %331 = vmatprep.subr.mxu0 0.0
    %332 = vmatpush2.msra.mxu0 0.0
    %333 = vmatprep.subr.mxu0 0.0
    %334 = vmatpush2.msra.mxu0 0.0
    %335 = vmatprep.subr.mxu0 0.0
    %336 = vmatpush2.msra.mxu0 0.0
    %337 = vmatprep.subr.mxu0 0.0
    %338 = vmatpush2.msra.mxu0 0.0
    %339 = vmatprep.subr.mxu0 0.0
    %340 = vmatpush2.msra.mxu0 0.0
    %341 = vmatprep.subr.mxu0 0.0
    %342 = vmatpush2.msra.mxu0 0.0
    %343 = vmatprep.subr.mxu0 0.0
    %344 = vmatpush2.msra.mxu0 0.0
    %345 = vmatprep.subr.mxu0 0.0
    %346 = vmatpush2.msra.mxu0 0.0
    %347 = vmatprep.subr.mxu0 0.0
    %348 = vmatpush2.msra.mxu0 0.0
    %349 = vmatprep.subr.mxu0 0.0
    %350 = vmatpush2.msra.mxu0 0.0
    %351 = vmatprep.subr.mxu0 0.0
    %352 = vmatpush2.msra.mxu0 0.0
    %353 = vmatprep.subr.mxu0 0.0
    %354 = vmatpush2.msra.mxu0 0.0
    %355 = vmatprep.subr.mxu0 0.0
    %356 = vmatpush2.msra.mxu0 0.0
    %357 = vmatprep.subr.mxu0 0.0
    %358 = vmatpush2.msra.mxu0 0.0
    %359 = vmatprep.subr.mxu0 0.0
    %360 = vmatpush2.msra.mxu0 0.0
    %361 = vmatprep.mubr.f32.mxu0 0.0
    %362 = vmatmul.mubr.f32.gmra.mxu0 %v289
    %v363 = vpop.f32.mrf.mxu0
    %v364 = vadd.f32 %v286, %v363
    %v365 = vpop.f32.mrf.mxu0
    %366 = vmatprep.mubr.f32.mxu0 0.0
    %367 = vmatmul.mubr.f32.gmra.mxu0 %v292
    %v368 = vpop.f32.mrf.mxu0
    %v369 = vadd.f32 %v286, %v368
    %v370 = vpop.f32.mrf.mxu0
    %371 = vdwg.mxu0
    %vm372 = vcmask 261120
    %373 = vst.msk [vmem:[#allocation10] sm:$0xff] %vm372, %v364
    %374 = vst.msk [vmem:[#allocation10 + $0x8] sm:$0xff] %vm372, %v369
    // Predicated region
    $region46: #{tpu_custom_call.1} parent=1 // pred_check
      _
    $region47: #{tpu_custom_call.1} parent=1 // pred_check_branch
      %376 = sbr.rel (0) target = $region49
    $region48: #{tpu_custom_call.1} parent=1 // pred_region
      %s378 = ssub.s32 256, 256
      %379 = vsyncadd [#allocation4], %s378
      %s380 = sshll.u32 [#allocation10], 4
      %s381 = int_to_ptr.vmem [resolvable:$true] %s380
      %386 = dma.vmem_to_hbm [thread:$0]  %s381, 256, %s7, [#allocation4], 128, 128, 8
    $region49: #{tpu_custom_call.1} parent=1 // pred_fallthru
      _
    // Predicated region
    $region50: #{tpu_custom_call.1} parent=1 // pred_check
      _
    $region51: #{tpu_custom_call.1} parent=1 // pred_check_branch
      %388 = sbr.rel (0) target = $region53
    $region52: #{tpu_custom_call.1} parent=1 // pred_region
      %389 = dma.done [#allocation4], 256
    $region53: #{tpu_custom_call.1} parent=1 // pred_fallthru
      _
    %390 = vsyncpa [#allocation3], 1
    %391 = vsyncpa [#allocation6], 1
    %392 = vsyncpa [#allocation9], 1
    %393 = vsyncpa [#allocation4], 1

</llo_original>
